<compile_context>
chip_gen: v6e
topology: v6e:2x2x1
jax: 0.10.0
libtpu: 0.0.40
codegen_flags: <defaults>
</compile_context>

<pallas_src>
import functools

import jax
import jax.numpy as jnp
from jax.experimental import pallas as pl
from jax.experimental.pallas import tpu as pltpu


def _std_partial_kernel(o_ref, g_ref, m_ref, part_ref,
                        acc_l, acc_lm, acc_l2m, acc_m,
                        *, hp, hp_t, spc, needs_mask):
    """One streamed H-tile step: accumulate per-(batch, lane) partial sums."""
    k = pl.program_id(1)

    @pl.when(k == 0)
    def _init():
        acc_l[...] = jnp.zeros_like(acc_l)
        acc_lm[...] = jnp.zeros_like(acc_lm)
        acc_l2m[...] = jnp.zeros_like(acc_l2m)
        acc_m[...] = jnp.zeros_like(acc_m)

    o = o_ref[...].astype(jnp.float32)     # (B, hp_t, L)
    g = g_ref[...].astype(jnp.float32)
    m = m_ref[...].astype(jnp.float32)

    if needs_mask:
        # Ragged tail / padded grid step: zero out rows past the true extent.
        step = pl.program_id(0) * spc + k                       # logical step
        rows = jax.lax.broadcasted_iota(jnp.int32, o.shape, 1)
        valid = (step * hp_t + rows) < hp
        o = jnp.where(valid, o, 0.0)
        g = jnp.where(valid, g, 0.0)
        m = jnp.where(valid, m, 0.0)

    # fused masking: loss = output*mask - groundtruth*mask = (o - g) * m
    loss = (o - g) * m
    lm = loss * m          # loss * mask
    l2m = loss * lm        # loss^2 * mask

    # sublane (XLU) reductions over this tile's rows; accumulate per (b, lane)
    acc_l[...] += jnp.sum(loss, axis=1)
    acc_lm[...] += jnp.sum(lm, axis=1)
    acc_l2m[...] += jnp.sum(l2m, axis=1)
    acc_m[...] += jnp.sum(m, axis=1)

    @pl.when(k == pl.num_programs(1) - 1)
    def _store():
        part_ref[0, 0, :, :] = acc_l[...]
        part_ref[0, 1, :, :] = acc_lm[...]
        part_ref[0, 2, :, :] = acc_l2m[...]
        part_ref[0, 3, :, :] = acc_m[...]


def std_pallas(output, groundtruth, mask, *, tile_rows=None):
    """Pallas TPU Std.forward (faithful to the PyTorch broadcasting, W == B).

    `tile_rows` (optional) is the number of *packed* rows per streamed tile.
    """
    assert output.shape == groundtruth.shape == mask.shape
    B, H, W = output.shape
    assert W == B, "reference PyTorch broadcasting requires W == B"

    # ---- lane packing: fold f H-rows into the lane axis (free reshape) -----
    if W >= 128:
        f = 1
    else:
        f = 1
        for cand in range(min(128 // W, H), 0, -1):
            if H % cand == 0:
                f = cand
                break
    L = f * W
    Hp = H // f
    if f > 1:
        output = output.reshape(B, Hp, L)
        groundtruth = groundtruth.reshape(B, Hp, L)
        mask = mask.reshape(B, Hp, L)

    # ---- per-chip tile / VMEM sizing ----------------------------------------
    try:
        vmem_cap = int(pltpu.get_tpu_info().vmem_capacity_bytes)
    except Exception:
        vmem_cap = 64 * 2 ** 20            # conservative fallback (v7x-sized)
    vmem_upper = max((vmem_cap * 3) // 4, 32 * 2 ** 20)
    tile_cap = max((vmem_upper - 4 * 2 ** 20) // 6, 2 * 2 ** 20)   # 3 in x 2 buf

    itemsize = jnp.dtype(output.dtype).itemsize
    align = max(8, 32 // max(itemsize, 1))      # 8 for f32, 16 for bf16
    bytes_per_row = B * L * itemsize
    cap_rows = max(align, tile_cap // max(bytes_per_row, 1))

    hp_t = Hp if tile_rows is None else max(1, min(int(tile_rows), Hp))
    hp_t = min(hp_t, cap_rows)
    if hp_t < Hp:
        hp_t = max(align, (hp_t // align) * align)
        if hp_t >= Hp:
            hp_t = Hp

    nblk = -(-Hp // hp_t)                        # total streamed steps
    ncores = 2 if nblk >= 2 else 1               # v7x megacore; harmless on 1-TC
    spc = -(-nblk // ncores)                     # steps per core
    needs_mask = (ncores * spc * hp_t != Hp)     # ragged tail or padded steps

    in_spec = pl.BlockSpec(
        (B, hp_t, L),
        lambda c, k: (0, jnp.minimum(c * spc + k, nblk - 1), 0))
    out_spec = pl.BlockSpec((1, 4, B, L), lambda c, k: (c, 0, 0, 0))

    tile_bytes = B * hp_t * L * itemsize
    scratch_bytes = 4 * B * L * 4
    vmem_limit = int(min(max(6 * tile_bytes + scratch_bytes + 2 * 2 ** 20,
                             32 * 2 ** 20),
                         vmem_upper))

    kernel = functools.partial(_std_partial_kernel, hp=Hp, hp_t=hp_t, spc=spc,
                               needs_mask=needs_mask)

    partials = pl.pallas_call(
        kernel,
        grid=(ncores, spc),
        in_specs=[in_spec, in_spec, in_spec],
        out_specs=out_spec,
        out_shape=jax.ShapeDtypeStruct((ncores, 4, B, L), jnp.float32),
        scratch_shapes=[pltpu.VMEM((B, L), jnp.float32)] * 4,
        compiler_params=pltpu.CompilerParams(
            dimension_semantics=("parallel", "arbitrary"),
            vmem_limit_bytes=vmem_limit,
        ),
    )(output, groundtruth, mask)

    # ---- tiny epilogue on (B, W) arrays (plain JAX, negligible) -------------
    p = partials.sum(axis=0)                         # (4, B, L) combine cores
    if f > 1:
        p = p.reshape(4, B, f, W).sum(axis=2)        # fold lanes back to W
    sum_l, sum_lm, sum_l2m, sum_m = p[0], p[1], p[2], p[3]   # each (B, W)

    s_b = jnp.sum(sum_l, axis=1, keepdims=True)      # (B,1)  S_b = Σ loss
    a_b = jnp.sum(sum_l2m, axis=1, keepdims=True)    # (B,1)  Σ loss²·mask
    predot = jnp.sum(sum_m, axis=1)                  # (B,)   predot_b
    inv_p = (1.0 / predot)[None, :]                  # (1,W)  lane w ↔ batch w

    # V_b = Σ(loss - S_b/P_w)^2·mask, one-pass algebraic expansion
    t2 = jnp.sum(sum_lm * inv_p, axis=1, keepdims=True)            # (B,1)
    t3 = jnp.sum(sum_m * (inv_p * inv_p), axis=1, keepdims=True)   # (B,1)
    v_b = jnp.maximum(a_b - 2.0 * s_b * t2 + (s_b * s_b) * t3, 0.0)

    para2 = jnp.sqrt(v_b * inv_p)                                   # (B, W)
    return jnp.mean(para2, axis=0, keepdims=True).astype(output.dtype)  # (1,W)


def std_reference(output, groundtruth, mask):
    """Pure-JAX mirror of the exact PyTorch op sequence (same broadcasting)."""
    yhat = output * mask
    gtruth = groundtruth * mask
    predot = jnp.sum(mask, axis=(1, 2))                              # (B,)
    loss = yhat - gtruth
    mean = jnp.sum(loss, axis=(1, 2), keepdims=True) / predot        # (B,1,B)
    para1 = ((loss - mean) ** 2) * mask
    para2 = jnp.sqrt(jnp.sum(para1, axis=(1, 2), keepdims=True) / predot)
    return jnp.mean(para2, axis=0)                                   # (1, B)


if __name__ == "__main__":
    B, H, W = 8, 512, 8   # W == B required by the reference code's broadcasting
    key = jax.random.PRNGKey(0)
    k1, k2, k3 = jax.random.split(key, 3)
    output = jax.random.normal(k1, (B, H, W), dtype=jnp.float32)
    groundtruth = jax.random.normal(k2, (B, H, W), dtype=jnp.float32)
    mask = (jax.random.uniform(k3, (B, H, W)) > 0.3).astype(jnp.float32)

    ref = std_reference(output, groundtruth, mask)

    # 1) default tiling: lane-packed (B, 32, 128) tiles, single grid step
    res = std_pallas(output, groundtruth, mask)
    jax.block_until_ready(res)
    assert res.shape == (1, B)
    assert jnp.allclose(res, ref, rtol=1e-4, atol=1e-5), (res, ref)

    # 2) streamed multi-step path with 2-way core split (grid (2, 2)):
    #    exercises init / accumulate / finalize and the parallel axis
    res_stream = std_pallas(output, groundtruth, mask, tile_rows=8)
    jax.block_until_ready(res_stream)
    assert jnp.allclose(res_stream, ref, rtol=1e-4, atol=1e-5), (res_stream, ref)

    # 3) ragged tail (Hp=32 streamed in rows of 24): exercises the in-kernel
    #    row-validity mask and the clamped index_map — no jnp.pad anywhere
    res_rag = std_pallas(output, groundtruth, mask, tile_rows=24)
    jax.block_until_ready(res_rag)
    assert jnp.allclose(res_rag, ref, rtol=1e-4, atol=1e-5), (res_rag, ref)

    # 4) bf16 inputs (v5e bandwidth path): kernel upcasts to f32 internally
    out_bf = output.astype(jnp.bfloat16)
    gt_bf = groundtruth.astype(jnp.bfloat16)
    ref_bf = std_reference(out_bf.astype(jnp.float32),
                           gt_bf.astype(jnp.float32), mask)
    res_bf = std_pallas(out_bf, gt_bf, mask.astype(jnp.bfloat16))
    jax.block_until_ready(res_bf)
    assert jnp.allclose(res_bf.astype(jnp.float32), ref_bf,
                        rtol=1e-2, atol=1e-2), (res_bf, ref_bf)

    print("KERNEL_OK")
</pallas_src>

<mosaic_0001>
module attributes {stable_mosaic.version = 11 : i64} {
  func.func @_std_partial_kernel(%arg0: i32, %arg1: i32, %arg2: memref<8x32x128xf32, #tpu.memory_space<vmem>>, %arg3: memref<8x32x128xf32, #tpu.memory_space<vmem>>, %arg4: memref<8x32x128xf32, #tpu.memory_space<vmem>>, %arg5: memref<1x4x8x128xf32, #tpu.memory_space<vmem>>, %arg6: memref<8x128xf32, #tpu.memory_space<vmem>>, %arg7: memref<8x128xf32, #tpu.memory_space<vmem>>, %arg8: memref<8x128xf32, #tpu.memory_space<vmem>>, %arg9: memref<8x128xf32, #tpu.memory_space<vmem>>) attributes {dimension_semantics = [#tpu.dimension_semantics<parallel>, #tpu.dimension_semantics<arbitrary>], iteration_bounds = array<i64: 1, 1>, scalar_prefetch = 0 : i64, scratch_operands = 4 : i64, tpu.core_type = #tpu.core_type<tc>, window_params = [{transform_indices = @transform_0, window_bounds = array<i64: 8, 32, 128>}, {transform_indices = @transform_1, window_bounds = array<i64: 8, 32, 128>}, {transform_indices = @transform_2, window_bounds = array<i64: 8, 32, 128>}, {transform_indices = @transform_3, window_bounds = array<i64: 1, 4, 8, 128>}]} {
    %c0_i32 = arith.constant 0 : i32
    %0 = arith.cmpi eq, %arg1, %c0_i32 : i32
    %1 = arith.extui %0 : i1 to i32
    %c0_i32_0 = arith.constant 0 : i32
    %2 = arith.cmpi ne, %1, %c0_i32_0 : i32
    scf.if %2 {
      %cst_30 = arith.constant 0.000000e+00 : f32
      %29 = vector.broadcast %cst_30 : f32 to vector<8x128xf32>
      %c0_31 = arith.constant 0 : index
      %c0_32 = arith.constant 0 : index
      %30 = vector.load %arg6[%c0_31, %c0_32] : memref<8x128xf32, #tpu.memory_space<vmem>>, vector<8x128xf32>
      tpu.vector_store %arg6[%c0_31, %c0_32], %29 {strides = array<i32>} : memref<8x128xf32, #tpu.memory_space<vmem>>, vector<8x128xf32>,
      %cst_33 = arith.constant 0.000000e+00 : f32
      %31 = vector.broadcast %cst_33 : f32 to vector<8x128xf32>
      %c0_34 = arith.constant 0 : index
      %c0_35 = arith.constant 0 : index
      %32 = vector.load %arg7[%c0_34, %c0_35] : memref<8x128xf32, #tpu.memory_space<vmem>>, vector<8x128xf32>
      tpu.vector_store %arg7[%c0_34, %c0_35], %31 {strides = array<i32>} : memref<8x128xf32, #tpu.memory_space<vmem>>, vector<8x128xf32>,
      %cst_36 = arith.constant 0.000000e+00 : f32
      %33 = vector.broadcast %cst_36 : f32 to vector<8x128xf32>
      %c0_37 = arith.constant 0 : index
      %c0_38 = arith.constant 0 : index
      %34 = vector.load %arg8[%c0_37, %c0_38] : memref<8x128xf32, #tpu.memory_space<vmem>>, vector<8x128xf32>
      tpu.vector_store %arg8[%c0_37, %c0_38], %33 {strides = array<i32>} : memref<8x128xf32, #tpu.memory_space<vmem>>, vector<8x128xf32>,
      %cst_39 = arith.constant 0.000000e+00 : f32
      %35 = vector.broadcast %cst_39 : f32 to vector<8x128xf32>
      %c0_40 = arith.constant 0 : index
      %c0_41 = arith.constant 0 : index
      %36 = vector.load %arg9[%c0_40, %c0_41] : memref<8x128xf32, #tpu.memory_space<vmem>>, vector<8x128xf32>
      tpu.vector_store %arg9[%c0_40, %c0_41], %35 {strides = array<i32>} : memref<8x128xf32, #tpu.memory_space<vmem>>, vector<8x128xf32>,
    } else {
    }
    %c0 = arith.constant 0 : index
    %c0_1 = arith.constant 0 : index
    %c0_2 = arith.constant 0 : index
    %3 = vector.load %arg2[%c0, %c0_1, %c0_2] : memref<8x32x128xf32, #tpu.memory_space<vmem>>, vector<8x32x128xf32>
    %c0_3 = arith.constant 0 : index
    %c0_4 = arith.constant 0 : index
    %c0_5 = arith.constant 0 : index
    %4 = vector.load %arg3[%c0_3, %c0_4, %c0_5] : memref<8x32x128xf32, #tpu.memory_space<vmem>>, vector<8x32x128xf32>
    %c0_6 = arith.constant 0 : index
    %c0_7 = arith.constant 0 : index
    %c0_8 = arith.constant 0 : index
    %5 = vector.load %arg4[%c0_6, %c0_7, %c0_8] : memref<8x32x128xf32, #tpu.memory_space<vmem>>, vector<8x32x128xf32>
    %6 = arith.subf %3, %4 : vector<8x32x128xf32>
    %7 = arith.mulf %6, %5 : vector<8x32x128xf32>
    %8 = arith.mulf %7, %5 : vector<8x32x128xf32>
    %9 = arith.mulf %7, %8 : vector<8x32x128xf32>
    %c0_9 = arith.constant 0 : index
    %c0_10 = arith.constant 0 : index
    %10 = vector.load %arg6[%c0_9, %c0_10] : memref<8x128xf32, #tpu.memory_space<vmem>>, vector<8x128xf32>
    %cst = arith.constant dense<0.000000e+00> : vector<8x128xf32>
    %11 = vector.multi_reduction <add>, %7, %cst [1] : vector<8x32x128xf32> to vector<8x128xf32>
    %12 = arith.addf %10, %11 : vector<8x128xf32>
    %c0_11 = arith.constant 0 : index
    %c0_12 = arith.constant 0 : index
    %13 = vector.load %arg6[%c0_11, %c0_12] : memref<8x128xf32, #tpu.memory_space<vmem>>, vector<8x128xf32>
    tpu.vector_store %arg6[%c0_11, %c0_12], %12 {strides = array<i32>} : memref<8x128xf32, #tpu.memory_space<vmem>>, vector<8x128xf32>,
    %c0_13 = arith.constant 0 : index
    %c0_14 = arith.constant 0 : index
    %14 = vector.load %arg7[%c0_13, %c0_14] : memref<8x128xf32, #tpu.memory_space<vmem>>, vector<8x128xf32>
    %cst_15 = arith.constant dense<0.000000e+00> : vector<8x128xf32>
    %15 = vector.multi_reduction <add>, %8, %cst_15 [1] : vector<8x32x128xf32> to vector<8x128xf32>
    %16 = arith.addf %14, %15 : vector<8x128xf32>
    %c0_16 = arith.constant 0 : index
    %c0_17 = arith.constant 0 : index
    %17 = vector.load %arg7[%c0_16, %c0_17] : memref<8x128xf32, #tpu.memory_space<vmem>>, vector<8x128xf32>
    tpu.vector_store %arg7[%c0_16, %c0_17], %16 {strides = array<i32>} : memref<8x128xf32, #tpu.memory_space<vmem>>, vector<8x128xf32>,
    %c0_18 = arith.constant 0 : index
    %c0_19 = arith.constant 0 : index
    %18 = vector.load %arg8[%c0_18, %c0_19] : memref<8x128xf32, #tpu.memory_space<vmem>>, vector<8x128xf32>
    %cst_20 = arith.constant dense<0.000000e+00> : vector<8x128xf32>
    %19 = vector.multi_reduction <add>, %9, %cst_20 [1] : vector<8x32x128xf32> to vector<8x128xf32>
    %20 = arith.addf %18, %19 : vector<8x128xf32>
    %c0_21 = arith.constant 0 : index
    %c0_22 = arith.constant 0 : index
    %21 = vector.load %arg8[%c0_21, %c0_22] : memref<8x128xf32, #tpu.memory_space<vmem>>, vector<8x128xf32>
    tpu.vector_store %arg8[%c0_21, %c0_22], %20 {strides = array<i32>} : memref<8x128xf32, #tpu.memory_space<vmem>>, vector<8x128xf32>,
    %c0_23 = arith.constant 0 : index
    %c0_24 = arith.constant 0 : index
    %22 = vector.load %arg9[%c0_23, %c0_24] : memref<8x128xf32, #tpu.memory_space<vmem>>, vector<8x128xf32>
    %cst_25 = arith.constant dense<0.000000e+00> : vector<8x128xf32>
    %23 = vector.multi_reduction <add>, %5, %cst_25 [1] : vector<8x32x128xf32> to vector<8x128xf32>
    %24 = arith.addf %22, %23 : vector<8x128xf32>
    %c0_26 = arith.constant 0 : index
    %c0_27 = arith.constant 0 : index
    %25 = vector.load %arg9[%c0_26, %c0_27] : memref<8x128xf32, #tpu.memory_space<vmem>>, vector<8x128xf32>
    tpu.vector_store %arg9[%c0_26, %c0_27], %24 {strides = array<i32>} : memref<8x128xf32, #tpu.memory_space<vmem>>, vector<8x128xf32>,
    %c0_i32_28 = arith.constant 0 : i32
    %26 = arith.cmpi eq, %arg1, %c0_i32_28 : i32
    %27 = arith.extui %26 : i1 to i32
    %c0_i32_29 = arith.constant 0 : i32
    %28 = arith.cmpi ne, %27, %c0_i32_29 : i32
    scf.if %28 {
      %c0_30 = arith.constant 0 : index
      %c0_31 = arith.constant 0 : index
      %29 = vector.load %arg6[%c0_30, %c0_31] : memref<8x128xf32, #tpu.memory_space<vmem>>, vector<8x128xf32>
      %c0_32 = arith.constant 0 : index
      %c0_33 = arith.constant 0 : index
      %c0_34 = arith.constant 0 : index
      %c0_35 = arith.constant 0 : index
      %30 = vector.load %arg5[%c0_32, %c0_33, %c0_34, %c0_35] : memref<1x4x8x128xf32, #tpu.memory_space<vmem>>, vector<1x1x8x128xf32>
      %31 = vector.shape_cast %30 : vector<1x1x8x128xf32> to vector<8x128xf32>
      %32 = vector.shape_cast %29 : vector<8x128xf32> to vector<1x1x8x128xf32>
      tpu.vector_store %arg5[%c0_32, %c0_33, %c0_34, %c0_35], %32 {strides = array<i32>} : memref<1x4x8x128xf32, #tpu.memory_space<vmem>>, vector<1x1x8x128xf32>,
      %c0_36 = arith.constant 0 : index
      %c0_37 = arith.constant 0 : index
      %33 = vector.load %arg7[%c0_36, %c0_37] : memref<8x128xf32, #tpu.memory_space<vmem>>, vector<8x128xf32>
      %c0_38 = arith.constant 0 : index
      %c1 = arith.constant 1 : index
      %c0_39 = arith.constant 0 : index
      %c0_40 = arith.constant 0 : index
      %34 = vector.load %arg5[%c0_38, %c1, %c0_39, %c0_40] : memref<1x4x8x128xf32, #tpu.memory_space<vmem>>, vector<1x1x8x128xf32>
      %35 = vector.shape_cast %34 : vector<1x1x8x128xf32> to vector<8x128xf32>
      %36 = vector.shape_cast %33 : vector<8x128xf32> to vector<1x1x8x128xf32>
      tpu.vector_store %arg5[%c0_38, %c1, %c0_39, %c0_40], %36 {strides = array<i32>} : memref<1x4x8x128xf32, #tpu.memory_space<vmem>>, vector<1x1x8x128xf32>,
      %c0_41 = arith.constant 0 : index
      %c0_42 = arith.constant 0 : index
      %37 = vector.load %arg8[%c0_41, %c0_42] : memref<8x128xf32, #tpu.memory_space<vmem>>, vector<8x128xf32>
      %c0_43 = arith.constant 0 : index
      %c2 = arith.constant 2 : index
      %c0_44 = arith.constant 0 : index
      %c0_45 = arith.constant 0 : index
      %38 = vector.load %arg5[%c0_43, %c2, %c0_44, %c0_45] : memref<1x4x8x128xf32, #tpu.memory_space<vmem>>, vector<1x1x8x128xf32>
      %39 = vector.shape_cast %38 : vector<1x1x8x128xf32> to vector<8x128xf32>
      %40 = vector.shape_cast %37 : vector<8x128xf32> to vector<1x1x8x128xf32>
      tpu.vector_store %arg5[%c0_43, %c2, %c0_44, %c0_45], %40 {strides = array<i32>} : memref<1x4x8x128xf32, #tpu.memory_space<vmem>>, vector<1x1x8x128xf32>,
      %c0_46 = arith.constant 0 : index
      %c0_47 = arith.constant 0 : index
      %41 = vector.load %arg9[%c0_46, %c0_47] : memref<8x128xf32, #tpu.memory_space<vmem>>, vector<8x128xf32>
      %c0_48 = arith.constant 0 : index
      %c3 = arith.constant 3 : index
      %c0_49 = arith.constant 0 : index
      %c0_50 = arith.constant 0 : index
      %42 = vector.load %arg5[%c0_48, %c3, %c0_49, %c0_50] : memref<1x4x8x128xf32, #tpu.memory_space<vmem>>, vector<1x1x8x128xf32>
      %43 = vector.shape_cast %42 : vector<1x1x8x128xf32> to vector<8x128xf32>
      %44 = vector.shape_cast %41 : vector<8x128xf32> to vector<1x1x8x128xf32>
      tpu.vector_store %arg5[%c0_48, %c3, %c0_49, %c0_50], %44 {strides = array<i32>} : memref<1x4x8x128xf32, #tpu.memory_space<vmem>>, vector<1x1x8x128xf32>,
    } else {
    }
    return
  }
  func.func @transform_0(%arg0: i32, %arg1: i32) -> (i32, i32, i32) {
    %c1_i32 = arith.constant 1 : i32
    %0 = arith.muli %arg0, %c1_i32 : i32
    %1 = arith.addi %0, %arg1 : i32
    %c0_i32 = arith.constant 0 : i32
    %2 = arith.minsi %1, %c0_i32 : i32
    %c0_i32_0 = arith.constant 0 : i32
    %c0_i32_1 = arith.constant 0 : i32
    %c0_i32_2 = arith.constant 0 : i32
    return %c0_i32_0, %2, %c0_i32_1 : i32, i32, i32
  }
  func.func @transform_1(%arg0: i32, %arg1: i32) -> (i32, i32, i32) {
    %c1_i32 = arith.constant 1 : i32
    %0 = arith.muli %arg0, %c1_i32 : i32
    %1 = arith.addi %0, %arg1 : i32
    %c0_i32 = arith.constant 0 : i32
    %2 = arith.minsi %1, %c0_i32 : i32
    %c0_i32_0 = arith.constant 0 : i32
    %c0_i32_1 = arith.constant 0 : i32
    %c0_i32_2 = arith.constant 0 : i32
    return %c0_i32_0, %2, %c0_i32_1 : i32, i32, i32
  }
  func.func @transform_2(%arg0: i32, %arg1: i32) -> (i32, i32, i32) {
    %c1_i32 = arith.constant 1 : i32
    %0 = arith.muli %arg0, %c1_i32 : i32
    %1 = arith.addi %0, %arg1 : i32
    %c0_i32 = arith.constant 0 : i32
    %2 = arith.minsi %1, %c0_i32 : i32
    %c0_i32_0 = arith.constant 0 : i32
    %c0_i32_1 = arith.constant 0 : i32
    %c0_i32_2 = arith.constant 0 : i32
    return %c0_i32_0, %2, %c0_i32_1 : i32, i32, i32
  }
  func.func @transform_3(%arg0: i32, %arg1: i32) -> (i32, i32, i32, i32) {
    %c0_i32 = arith.constant 0 : i32
    %c0_i32_0 = arith.constant 0 : i32
    %c0_i32_1 = arith.constant 0 : i32
    %c0_i32_2 = arith.constant 0 : i32
    return %arg0, %c0_i32, %c0_i32_0, %c0_i32_1 : i32, i32, i32, i32
  }
}

</mosaic_0001>

<llo_original>
// kernel: tpu_custom_call.1
$region0: #{tpu_custom_call.1}
  #allocation0 [shape = 'u32[]', space=smem, size = 0x4, offset = 0x4, fixed_abs, tag = 'smem constant byte address 0x4 - core index']
  #allocation1 [shape = 'u32[144,128]{1,0:T(1,128)}', space=vmem, size = 0x12000, scoped, tag = 'internal scratch']
  #allocation2 [shape = 'f32[8,128]{1,0:T(8,128)}', space=vmem, size = 0x1000, scoped, tag = 'scratch operand']
  #allocation3 [shape = 'f32[8,128]{1,0:T(8,128)}', space=vmem, size = 0x1000, scoped, tag = 'scratch operand']
  #allocation4 [shape = 'f32[8,128]{1,0:T(8,128)}', space=vmem, size = 0x1000, scoped, tag = 'scratch operand']
  #allocation5 [shape = 'f32[8,128]{1,0:T(8,128)}', space=vmem, size = 0x1000, scoped, tag = 'scratch operand']
  %s0 = inlined_call_operand.hbm [shape: f32[8,32,128], index: 0, kind: input, shape index: {}]
  %s1 = inlined_call_operand.hbm [shape: f32[8,32,128], index: 1, kind: input, shape index: {}]
  %s2 = inlined_call_operand.hbm [shape: f32[8,32,128], index: 2, kind: input, shape index: {}]
  %s3 = inlined_call_operand.hbm [shape: f32[1,4,8,128], index: 3, kind: output, shape index: {}]
  %s4 = sld [smem:[#allocation0]]
  $region42: #{tpu_custom_call.1} parent=0
    _
  %s6 = ssub.s32 1, %s4
  %s7 = scalar_select 0, %s6, %s4
  $region1: #{tpu_custom_call.1} parent=0
    #allocation6 [shape = 'u8[131072]{0}', space=vmem, size = 0x20000, scoped, tag = 'input window, operand 0, single buffered']
    #allocation7 [shape = 's32[1]{0}', space=sflag, size = 0x4, scoped, tag = 'scoped memory for tpu_custom_call.1']
    #allocation8 [shape = 's32[1]{0}', space=sflag, size = 0x4, scoped, tag = 'scoped memory for tpu_custom_call.1']
    #allocation9 [shape = 'u8[131072]{0}', space=vmem, size = 0x20000, scoped, tag = 'input window, operand 1, single buffered']
    #allocation10 [shape = 's32[1]{0}', space=sflag, size = 0x4, scoped, tag = 'scoped memory for tpu_custom_call.1']
    #allocation11 [shape = 'u8[131072]{0}', space=vmem, size = 0x20000, scoped, tag = 'input window, operand 2, single buffered']
    #allocation12 [shape = 'u8[16384]{0}', space=vmem, size = 0x4000, scoped, tag = 'output window, operand 0, single buffered']
    %8 = vsyncpa [#allocation7], 0
    %9 = vsyncpa [#allocation10], 0
    %10 = vsyncpa [#allocation8], 0
    // Predicated region
    $region2: #{tpu_custom_call.1} parent=1 // pred_check
      _
    $region3: #{tpu_custom_call.1} parent=1 // pred_check_branch
      %12 = sbr.rel (0) target = $region5
    $region4: #{tpu_custom_call.1} parent=1 // pred_region
      %s13 = sadd.s32 0, 0
      %p14 = scmp.lt.s32.totalorder %s13, 0
      %s15 = scalar_select %p14, %s13, 0
      %s16 = smul.u32 4, %s15
      %s18 = ssub.s32 4096, 4096
      %19 = vsyncadd [#allocation7], %s18
      %s20 = smul.addr %s16, 128
      %s21 = scalar_lea.hbm %s0, %s20
      %s22 = sshll.u32 [#allocation6], 4
      %s23 = int_to_ptr.vmem [resolvable:$true] %s22
      %28 = dma.hbm_to_vmem [thread:$0]  %s21, 4096, %s23, [#allocation7], 128, 128, 8
    $region5: #{tpu_custom_call.1} parent=1 // pred_fallthru
      _
    // Predicated region
    $region6: #{tpu_custom_call.1} parent=1 // pred_check
      _
    $region7: #{tpu_custom_call.1} parent=1 // pred_check_branch
      %30 = sbr.rel (0) target = $region9
    $region8: #{tpu_custom_call.1} parent=1 // pred_region
      %s31 = sadd.s32 0, 0
      %p32 = scmp.lt.s32.totalorder %s31, 0
      %s33 = scalar_select %p32, %s31, 0
      %s34 = smul.u32 4, %s33
      %s36 = ssub.s32 4096, 4096
      %37 = vsyncadd [#allocation10], %s36
      %s38 = smul.addr %s34, 128
      %s39 = scalar_lea.hbm %s1, %s38
      %s40 = sshll.u32 [#allocation9], 4
      %s41 = int_to_ptr.vmem [resolvable:$true] %s40
      %46 = dma.hbm_to_vmem [thread:$0]  %s39, 4096, %s41, [#allocation10], 128, 128, 8
    $region9: #{tpu_custom_call.1} parent=1 // pred_fallthru
      _
    // Predicated region
    $region10: #{tpu_custom_call.1} parent=1 // pred_check
      _
    $region11: #{tpu_custom_call.1} parent=1 // pred_check_branch
      %48 = sbr.rel (0) target = $region13
    $region12: #{tpu_custom_call.1} parent=1 // pred_region
      %s49 = sadd.s32 0, 0
      %p50 = scmp.lt.s32.totalorder %s49, 0
      %s51 = scalar_select %p50, %s49, 0
      %s52 = smul.u32 4, %s51
      %s54 = ssub.s32 4096, 4096
      %55 = vsyncadd [#allocation10], %s54
      %s56 = smul.addr %s52, 128
      %s57 = scalar_lea.hbm %s2, %s56
      %s58 = sshll.u32 [#allocation11], 4
      %s59 = int_to_ptr.vmem [resolvable:$true] %s58
      %64 = dma.hbm_to_vmem [thread:$0]  %s57, 4096, %s59, [#allocation10], 128, 128, 8
    $region13: #{tpu_custom_call.1} parent=1 // pred_fallthru
      _
    // Predicated region
    $region14: #{tpu_custom_call.1} parent=1 // pred_check
      _
    $region15: #{tpu_custom_call.1} parent=1 // pred_check_branch
      %66 = sbr.rel (0) target = $region17
    $region16: #{tpu_custom_call.1} parent=1 // pred_region
      %67 = dma.done [#allocation7], 4096
    $region17: #{tpu_custom_call.1} parent=1 // pred_fallthru
      _
    // Predicated region
    $region18: #{tpu_custom_call.1} parent=1 // pred_check
      _
    $region19: #{tpu_custom_call.1} parent=1 // pred_check_branch
      %69 = sbr.rel (0) target = $region21
    $region20: #{tpu_custom_call.1} parent=1 // pred_region
      %70 = dma.done [#allocation10], 4096
    $region21: #{tpu_custom_call.1} parent=1 // pred_fallthru
      _
    // Predicated region
    $region22: #{tpu_custom_call.1} parent=1 // pred_check
      _
    $region23: #{tpu_custom_call.1} parent=1 // pred_check_branch
      %72 = sbr.rel (0) target = $region25
    $region24: #{tpu_custom_call.1} parent=1 // pred_region
      %73 = dma.done [#allocation10], 4096
    $region25: #{tpu_custom_call.1} parent=1 // pred_fallthru
      _
    %s74 = sadd.s32 0, 0
    %p75 = scmp.lt.s32.totalorder %s74, 0
    %s76 = scalar_select %p75, %s74, 0
    %s77 = smul.u32 4, %s76
    %s78 = sadd.s32 0, 0
    %p79 = scmp.lt.s32.totalorder %s78, 0
    %s80 = scalar_select %p79, %s78, 0
    %s81 = smul.u32 4, %s80
    %s82 = sadd.s32 0, 0
    %p83 = scmp.lt.s32.totalorder %s82, 0
    %s84 = scalar_select %p83, %s82, 0
    %s85 = smul.u32 4, %s84
    %p86 = scmp.eq.s32.totalorder 0, 0
    // Predicated region
    $region26: #{tpu_custom_call.1} parent=1 // pred_check
      %p87 = pneg %p86
    $region27: #{tpu_custom_call.1} parent=1 // pred_check_branch
      %89 = sbr.rel (%p87) target = $region29
    $region28: #{tpu_custom_call.1} parent=1 // pred_region
      %90 = vst [vmem:[#allocation2] sm:$0xff] 0.0
      %91 = vst [vmem:[#allocation3] sm:$0xff] 0.0
      %92 = vst [vmem:[#allocation4] sm:$0xff] 0.0
      %93 = vst [vmem:[#allocation5] sm:$0xff] 0.0
    $region29: #{tpu_custom_call.1} parent=1 // pred_fallthru
      _
    %v94 = vld [vmem:[#allocation6] sm:$0xff]
    %v95 = vld [vmem:[#allocation6 + $0x8] sm:$0xff]
    %v96 = vld [vmem:[#allocation6 + $0x10] sm:$0xff]
    %v97 = vld [vmem:[#allocation6 + $0x18] sm:$0xff]
    %v98 = vld [vmem:[#allocation6 + $0x20] sm:$0xff]
    %v99 = vld [vmem:[#allocation6 + $0x28] sm:$0xff]
    %v100 = vld [vmem:[#allocation6 + $0x30] sm:$0xff]
    %v101 = vld [vmem:[#allocation6 + $0x38] sm:$0xff]
    %v102 = vld [vmem:[#allocation6 + $0x40] sm:$0xff]
    %v103 = vld [vmem:[#allocation6 + $0x48] sm:$0xff]
    %v104 = vld [vmem:[#allocation6 + $0x50] sm:$0xff]
    %v105 = vld [vmem:[#allocation6 + $0x58] sm:$0xff]
    %v106 = vld [vmem:[#allocation6 + $0x60] sm:$0xff]
    %v107 = vld [vmem:[#allocation6 + $0x68] sm:$0xff]
    %v108 = vld [vmem:[#allocation6 + $0x70] sm:$0xff]
    %v109 = vld [vmem:[#allocation6 + $0x78] sm:$0xff]
    %v110 = vld [vmem:[#allocation6 + $0x80] sm:$0xff]
    %v111 = vld [vmem:[#allocation6 + $0x88] sm:$0xff]
    %v112 = vld [vmem:[#allocation6 + $0x90] sm:$0xff]
    %v113 = vld [vmem:[#allocation6 + $0x98] sm:$0xff]
    %v114 = vld [vmem:[#allocation6 + $0xa0] sm:$0xff]
    %v115 = vld [vmem:[#allocation6 + $0xa8] sm:$0xff]
    %v116 = vld [vmem:[#allocation6 + $0xb0] sm:$0xff]
    %v117 = vld [vmem:[#allocation6 + $0xb8] sm:$0xff]
    %v118 = vld [vmem:[#allocation6 + $0xc0] sm:$0xff]
    %v119 = vld [vmem:[#allocation6 + $0xc8] sm:$0xff]
    %v120 = vld [vmem:[#allocation6 + $0xd0] sm:$0xff]
    %v121 = vld [vmem:[#allocation6 + $0xd8] sm:$0xff]
    %v122 = vld [vmem:[#allocation6 + $0xe0] sm:$0xff]
    %v123 = vld [vmem:[#allocation6 + $0xe8] sm:$0xff]
    %v124 = vld [vmem:[#allocation6 + $0xf0] sm:$0xff]
    %v125 = vld [vmem:[#allocation6 + $0xf8] sm:$0xff]
    %v126 = vld [vmem:[#allocation9] sm:$0xff]
    %v127 = vld [vmem:[#allocation9 + $0x8] sm:$0xff]
    %v128 = vld [vmem:[#allocation9 + $0x10] sm:$0xff]
    %v129 = vld [vmem:[#allocation9 + $0x18] sm:$0xff]
    %v130 = vld [vmem:[#allocation9 + $0x20] sm:$0xff]
    %v131 = vld [vmem:[#allocation9 + $0x28] sm:$0xff]
    %v132 = vld [vmem:[#allocation9 + $0x30] sm:$0xff]
    %v133 = vld [vmem:[#allocation9 + $0x38] sm:$0xff]
    %v134 = vld [vmem:[#allocation9 + $0x40] sm:$0xff]
    %v135 = vld [vmem:[#allocation9 + $0x48] sm:$0xff]
    %v136 = vld [vmem:[#allocation9 + $0x50] sm:$0xff]
    %v137 = vld [vmem:[#allocation9 + $0x58] sm:$0xff]
    %v138 = vld [vmem:[#allocation9 + $0x60] sm:$0xff]
    %v139 = vld [vmem:[#allocation9 + $0x68] sm:$0xff]
    %v140 = vld [vmem:[#allocation9 + $0x70] sm:$0xff]
    %v141 = vld [vmem:[#allocation9 + $0x78] sm:$0xff]
    %v142 = vld [vmem:[#allocation9 + $0x80] sm:$0xff]
    %v143 = vld [vmem:[#allocation9 + $0x88] sm:$0xff]
    %v144 = vld [vmem:[#allocation9 + $0x90] sm:$0xff]
    %v145 = vld [vmem:[#allocation9 + $0x98] sm:$0xff]
    %v146 = vld [vmem:[#allocation9 + $0xa0] sm:$0xff]
    %v147 = vld [vmem:[#allocation9 + $0xa8] sm:$0xff]
    %v148 = vld [vmem:[#allocation9 + $0xb0] sm:$0xff]
    %v149 = vld [vmem:[#allocation9 + $0xb8] sm:$0xff]
    %v150 = vld [vmem:[#allocation9 + $0xc0] sm:$0xff]
    %v151 = vld [vmem:[#allocation9 + $0xc8] sm:$0xff]
    %v152 = vld [vmem:[#allocation9 + $0xd0] sm:$0xff]
    %v153 = vld [vmem:[#allocation9 + $0xd8] sm:$0xff]
    %v154 = vld [vmem:[#allocation9 + $0xe0] sm:$0xff]
    %v155 = vld [vmem:[#allocation9 + $0xe8] sm:$0xff]
    %v156 = vld [vmem:[#allocation9 + $0xf0] sm:$0xff]
    %v157 = vld [vmem:[#allocation9 + $0xf8] sm:$0xff]
    %v158 = vld [vmem:[#allocation11] sm:$0xff]
    %v159 = vld [vmem:[#allocation11 + $0x8] sm:$0xff]
    %v160 = vld [vmem:[#allocation11 + $0x10] sm:$0xff]
    %v161 = vld [vmem:[#allocation11 + $0x18] sm:$0xff]
    %v162 = vld [vmem:[#allocation11 + $0x20] sm:$0xff]
    %v163 = vld [vmem:[#allocation11 + $0x28] sm:$0xff]
    %v164 = vld [vmem:[#allocation11 + $0x30] sm:$0xff]
    %v165 = vld [vmem:[#allocation11 + $0x38] sm:$0xff]
    %v166 = vld [vmem:[#allocation11 + $0x40] sm:$0xff]
    %v167 = vld [vmem:[#allocation11 + $0x48] sm:$0xff]
    %v168 = vld [vmem:[#allocation11 + $0x50] sm:$0xff]
    %v169 = vld [vmem:[#allocation11 + $0x58] sm:$0xff]
    %v170 = vld [vmem:[#allocation11 + $0x60] sm:$0xff]
    %v171 = vld [vmem:[#allocation11 + $0x68] sm:$0xff]
    %v172 = vld [vmem:[#allocation11 + $0x70] sm:$0xff]
    %v173 = vld [vmem:[#allocation11 + $0x78] sm:$0xff]
    %v174 = vld [vmem:[#allocation11 + $0x80] sm:$0xff]
    %v175 = vld [vmem:[#allocation11 + $0x88] sm:$0xff]
    %v176 = vld [vmem:[#allocation11 + $0x90] sm:$0xff]
    %v177 = vld [vmem:[#allocation11 + $0x98] sm:$0xff]
    %v178 = vld [vmem:[#allocation11 + $0xa0] sm:$0xff]
    %v179 = vld [vmem:[#allocation11 + $0xa8] sm:$0xff]
    %v180 = vld [vmem:[#allocation11 + $0xb0] sm:$0xff]
    %v181 = vld [vmem:[#allocation11 + $0xb8] sm:$0xff]
    %v182 = vld [vmem:[#allocation11 + $0xc0] sm:$0xff]
    %v183 = vld [vmem:[#allocation11 + $0xc8] sm:$0xff]
    %v184 = vld [vmem:[#allocation11 + $0xd0] sm:$0xff]
    %v185 = vld [vmem:[#allocation11 + $0xd8] sm:$0xff]
    %v186 = vld [vmem:[#allocation11 + $0xe0] sm:$0xff]
    %v187 = vld [vmem:[#allocation11 + $0xe8] sm:$0xff]
    %v188 = vld [vmem:[#allocation11 + $0xf0] sm:$0xff]
    %v189 = vld [vmem:[#allocation11 + $0xf8] sm:$0xff]
    %v190 = vsub.f32 %v94, %v126
    %v191 = vsub.f32 %v95, %v127
    %v192 = vsub.f32 %v96, %v128
    %v193 = vsub.f32 %v97, %v129
    %v194 = vsub.f32 %v98, %v130
    %v195 = vsub.f32 %v99, %v131
    %v196 = vsub.f32 %v100, %v132
    %v197 = vsub.f32 %v101, %v133
    %v198 = vsub.f32 %v102, %v134
    %v199 = vsub.f32 %v103, %v135
    %v200 = vsub.f32 %v104, %v136
    %v201 = vsub.f32 %v105, %v137
    %v202 = vsub.f32 %v106, %v138
    %v203 = vsub.f32 %v107, %v139
    %v204 = vsub.f32 %v108, %v140
    %v205 = vsub.f32 %v109, %v141
    %v206 = vsub.f32 %v110, %v142
    %v207 = vsub.f32 %v111, %v143
    %v208 = vsub.f32 %v112, %v144
    %v209 = vsub.f32 %v113, %v145
    %v210 = vsub.f32 %v114, %v146
    %v211 = vsub.f32 %v115, %v147
    %v212 = vsub.f32 %v116, %v148
    %v213 = vsub.f32 %v117, %v149
    %v214 = vsub.f32 %v118, %v150
    %v215 = vsub.f32 %v119, %v151
    %v216 = vsub.f32 %v120, %v152
    %v217 = vsub.f32 %v121, %v153
    %v218 = vsub.f32 %v122, %v154
    %v219 = vsub.f32 %v123, %v155
    %v220 = vsub.f32 %v124, %v156
    %v221 = vsub.f32 %v125, %v157
    %v222 = vmul.f32 %v190, %v158
    %v223 = vmul.f32 %v191, %v159
    %v224 = vmul.f32 %v192, %v160
    %v225 = vmul.f32 %v193, %v161
    %v226 = vmul.f32 %v194, %v162
    %v227 = vmul.f32 %v195, %v163
    %v228 = vmul.f32 %v196, %v164
    %v229 = vmul.f32 %v197, %v165
    %v230 = vmul.f32 %v198, %v166
    %v231 = vmul.f32 %v199, %v167
    %v232 = vmul.f32 %v200, %v168
    %v233 = vmul.f32 %v201, %v169
    %v234 = vmul.f32 %v202, %v170
    %v235 = vmul.f32 %v203, %v171
    %v236 = vmul.f32 %v204, %v172
    %v237 = vmul.f32 %v205, %v173
    %v238 = vmul.f32 %v206, %v174
    %v239 = vmul.f32 %v207, %v175
    %v240 = vmul.f32 %v208, %v176
    %v241 = vmul.f32 %v209, %v177
    %v242 = vmul.f32 %v210, %v178
    %v243 = vmul.f32 %v211, %v179
    %v244 = vmul.f32 %v212, %v180
    %v245 = vmul.f32 %v213, %v181
    %v246 = vmul.f32 %v214, %v182
    %v247 = vmul.f32 %v215, %v183
    %v248 = vmul.f32 %v216, %v184
    %v249 = vmul.f32 %v217, %v185
    %v250 = vmul.f32 %v218, %v186
    %v251 = vmul.f32 %v219, %v187
    %v252 = vmul.f32 %v220, %v188
    %v253 = vmul.f32 %v221, %v189
    %v254 = vmul.f32 %v222, %v158
    %v255 = vmul.f32 %v223, %v159
    %v256 = vmul.f32 %v224, %v160
    %v257 = vmul.f32 %v225, %v161
    %v258 = vmul.f32 %v226, %v162
    %v259 = vmul.f32 %v227, %v163
    %v260 = vmul.f32 %v228, %v164
    %v261 = vmul.f32 %v229, %v165
    %v262 = vmul.f32 %v230, %v166
    %v263 = vmul.f32 %v231, %v167
    %v264 = vmul.f32 %v232, %v168
    %v265 = vmul.f32 %v233, %v169
    %v266 = vmul.f32 %v234, %v170
    %v267 = vmul.f32 %v235, %v171
    %v268 = vmul.f32 %v236, %v172
    %v269 = vmul.f32 %v237, %v173
    %v270 = vmul.f32 %v238, %v174
    %v271 = vmul.f32 %v239, %v175
    %v272 = vmul.f32 %v240, %v176
    %v273 = vmul.f32 %v241, %v177
    %v274 = vmul.f32 %v242, %v178
    %v275 = vmul.f32 %v243, %v179
    %v276 = vmul.f32 %v244, %v180
    %v277 = vmul.f32 %v245, %v181
    %v278 = vmul.f32 %v246, %v182
    %v279 = vmul.f32 %v247, %v183
    %v280 = vmul.f32 %v248, %v184
    %v281 = vmul.f32 %v249, %v185
    %v282 = vmul.f32 %v250, %v186
    %v283 = vmul.f32 %v251, %v187
    %v284 = vmul.f32 %v252, %v188
    %v285 = vmul.f32 %v253, %v189
    %v286 = vmul.f32 %v222, %v254
    %v287 = vmul.f32 %v223, %v255
    %v288 = vmul.f32 %v224, %v256
    %v289 = vmul.f32 %v225, %v257
    %v290 = vmul.f32 %v226, %v258
    %v291 = vmul.f32 %v227, %v259
    %v292 = vmul.f32 %v228, %v260
    %v293 = vmul.f32 %v229, %v261
    %v294 = vmul.f32 %v230, %v262
    %v295 = vmul.f32 %v231, %v263
    %v296 = vmul.f32 %v232, %v264
    %v297 = vmul.f32 %v233, %v265
    %v298 = vmul.f32 %v234, %v266
    %v299 = vmul.f32 %v235, %v267
    %v300 = vmul.f32 %v236, %v268
    %v301 = vmul.f32 %v237, %v269
    %v302 = vmul.f32 %v238, %v270
    %v303 = vmul.f32 %v239, %v271
    %v304 = vmul.f32 %v240, %v272
    %v305 = vmul.f32 %v241, %v273
    %v306 = vmul.f32 %v242, %v274
    %v307 = vmul.f32 %v243, %v275
    %v308 = vmul.f32 %v244, %v276
    %v309 = vmul.f32 %v245, %v277
    %v310 = vmul.f32 %v246, %v278
    %v311 = vmul.f32 %v247, %v279
    %v312 = vmul.f32 %v248, %v280
    %v313 = vmul.f32 %v249, %v281
    %v314 = vmul.f32 %v250, %v282
    %v315 = vmul.f32 %v251, %v283
    %v316 = vmul.f32 %v252, %v284
    %v317 = vmul.f32 %v253, %v285
    %v318 = vld [vmem:[#allocation2] sm:$0xff]
    %v319 = vadd.f32 %v222, %v223
    %v320 = vadd.f32 %v319, %v224
    %v321 = vadd.f32 %v320, %v225
    %v322 = vrot.slane %v321, 4
    %v323 = vadd.f32 %v321, %v322
    %v324 = vrot.slane %v323, 2
    %v325 = vadd.f32 %v323, %v324
    %v326 = vrot.slane %v325, 1
    %v327 = vadd.f32 %v325, %v326
    %v328 = vadd.f32 %v226, %v227
    %v329 = vadd.f32 %v328, %v228
    %v330 = vadd.f32 %v329, %v229
    %v331 = vrot.slane %v330, 4
    %v332 = vadd.f32 %v330, %v331
    %v333 = vrot.slane %v332, 2
    %v334 = vadd.f32 %v332, %v333
    %v335 = vrot.slane %v334, 1
    %v336 = vadd.f32 %v334, %v335
    %v337 = vadd.f32 %v230, %v231
    %v338 = vadd.f32 %v337, %v232
    %v339 = vadd.f32 %v338, %v233
    %v340 = vrot.slane %v339, 4
    %v341 = vadd.f32 %v339, %v340
    %v342 = vrot.slane %v341, 2
    %v343 = vadd.f32 %v341, %v342
    %v344 = vrot.slane %v343, 1
    %v345 = vadd.f32 %v343, %v344
    %v346 = vadd.f32 %v234, %v235
    %v347 = vadd.f32 %v346, %v236
    %v348 = vadd.f32 %v347, %v237
    %v349 = vrot.slane %v348, 4
    %v350 = vadd.f32 %v348, %v349
    %v351 = vrot.slane %v350, 2
    %v352 = vadd.f32 %v350, %v351
    %v353 = vrot.slane %v352, 1
    %v354 = vadd.f32 %v352, %v353
    %v355 = vadd.f32 %v238, %v239
    %v356 = vadd.f32 %v355, %v240
    %v357 = vadd.f32 %v356, %v241
    %v358 = vrot.slane %v357, 4
    %v359 = vadd.f32 %v357, %v358
    %v360 = vrot.slane %v359, 2
    %v361 = vadd.f32 %v359, %v360
    %v362 = vrot.slane %v361, 1
    %v363 = vadd.f32 %v361, %v362
    %v364 = vadd.f32 %v242, %v243
    %v365 = vadd.f32 %v364, %v244
    %v366 = vadd.f32 %v365, %v245
    %v367 = vrot.slane %v366, 4
    %v368 = vadd.f32 %v366, %v367
    %v369 = vrot.slane %v368, 2
    %v370 = vadd.f32 %v368, %v369
    %v371 = vrot.slane %v370, 1
    %v372 = vadd.f32 %v370, %v371
    %v373 = vadd.f32 %v246, %v247
    %v374 = vadd.f32 %v373, %v248
    %v375 = vadd.f32 %v374, %v249
    %v376 = vrot.slane %v375, 4
    %v377 = vadd.f32 %v375, %v376
    %v378 = vrot.slane %v377, 2
    %v379 = vadd.f32 %v377, %v378
    %v380 = vrot.slane %v379, 1
    %v381 = vadd.f32 %v379, %v380
    %v382 = vadd.f32 %v250, %v251
    %v383 = vadd.f32 %v382, %v252
    %v384 = vadd.f32 %v383, %v253
    %v385 = vrot.slane %v384, 4
    %v386 = vadd.f32 %v384, %v385
    %v387 = vrot.slane %v386, 2
    %v388 = vadd.f32 %v386, %v387
    %v389 = vrot.slane %v388, 1
    %v390 = vadd.f32 %v388, %v389
    %vm399 = vcmask 1041409
    %v400 = vsel %vm399, %v336, %v327
    %vm401 = vcmask 1042434
    %v402 = vsel %vm401, %v345, %v400
    %vm403 = vcmask 1043459
    %v404 = vsel %vm403, %v354, %v402
    %vm405 = vcmask 1044484
    %v406 = vsel %vm405, %v363, %v404
    %vm407 = vcmask 1045509
    %v408 = vsel %vm407, %v372, %v406
    %vm409 = vcmask 1046534
    %v410 = vsel %vm409, %v381, %v408
    %vm411 = vcmask 1047559
    %v412 = vsel %vm411, %v390, %v410
    %v414 = vadd.f32 %v318, %v412
    %415 = vst [vmem:[#allocation2] sm:$0xff] %v414
    %v416 = vld [vmem:[#allocation3] sm:$0xff]
    %v417 = vadd.f32 %v254, %v255
    %v418 = vadd.f32 %v417, %v256
    %v419 = vadd.f32 %v418, %v257
    %v420 = vrot.slane %v419, 4
    %v421 = vadd.f32 %v419, %v420
    %v422 = vrot.slane %v421, 2
    %v423 = vadd.f32 %v421, %v422
    %v424 = vrot.slane %v423, 1
    %v425 = vadd.f32 %v423, %v424
    %v426 = vadd.f32 %v258, %v259
    %v427 = vadd.f32 %v426, %v260
    %v428 = vadd.f32 %v427, %v261
    %v429 = vrot.slane %v428, 4
    %v430 = vadd.f32 %v428, %v429
    %v431 = vrot.slane %v430, 2
    %v432 = vadd.f32 %v430, %v431
    %v433 = vrot.slane %v432, 1
    %v434 = vadd.f32 %v432, %v433
    %v435 = vadd.f32 %v262, %v263
    %v436 = vadd.f32 %v435, %v264
    %v437 = vadd.f32 %v436, %v265
    %v438 = vrot.slane %v437, 4
    %v439 = vadd.f32 %v437, %v438
    %v440 = vrot.slane %v439, 2
    %v441 = vadd.f32 %v439, %v440
    %v442 = vrot.slane %v441, 1
    %v443 = vadd.f32 %v441, %v442
    %v444 = vadd.f32 %v266, %v267
    %v445 = vadd.f32 %v444, %v268
    %v446 = vadd.f32 %v445, %v269
    %v447 = vrot.slane %v446, 4
    %v448 = vadd.f32 %v446, %v447
    %v449 = vrot.slane %v448, 2
    %v450 = vadd.f32 %v448, %v449
    %v451 = vrot.slane %v450, 1
    %v452 = vadd.f32 %v450, %v451
    %v453 = vadd.f32 %v270, %v271
    %v454 = vadd.f32 %v453, %v272
    %v455 = vadd.f32 %v454, %v273
    %v456 = vrot.slane %v455, 4
    %v457 = vadd.f32 %v455, %v456
    %v458 = vrot.slane %v457, 2
    %v459 = vadd.f32 %v457, %v458
    %v460 = vrot.slane %v459, 1
    %v461 = vadd.f32 %v459, %v460
    %v462 = vadd.f32 %v274, %v275
    %v463 = vadd.f32 %v462, %v276
    %v464 = vadd.f32 %v463, %v277
    %v465 = vrot.slane %v464, 4
    %v466 = vadd.f32 %v464, %v465
    %v467 = vrot.slane %v466, 2
    %v468 = vadd.f32 %v466, %v467
    %v469 = vrot.slane %v468, 1
    %v470 = vadd.f32 %v468, %v469
    %v471 = vadd.f32 %v278, %v279
    %v472 = vadd.f32 %v471, %v280
    %v473 = vadd.f32 %v472, %v281
    %v474 = vrot.slane %v473, 4
    %v475 = vadd.f32 %v473, %v474
    %v476 = vrot.slane %v475, 2
    %v477 = vadd.f32 %v475, %v476
    %v478 = vrot.slane %v477, 1
    %v479 = vadd.f32 %v477, %v478
    %v480 = vadd.f32 %v282, %v283
    %v481 = vadd.f32 %v480, %v284
    %v482 = vadd.f32 %v481, %v285
    %v483 = vrot.slane %v482, 4
    %v484 = vadd.f32 %v482, %v483
    %v485 = vrot.slane %v484, 2
    %v486 = vadd.f32 %v484, %v485
    %v487 = vrot.slane %v486, 1
    %v488 = vadd.f32 %v486, %v487
    %v497 = vsel %vm399, %v434, %v425
    %v498 = vsel %vm401, %v443, %v497
    %v499 = vsel %vm403, %v452, %v498
    %v500 = vsel %vm405, %v461, %v499
    %v501 = vsel %vm407, %v470, %v500
    %v502 = vsel %vm409, %v479, %v501
    %v503 = vsel %vm411, %v488, %v502
    %v505 = vadd.f32 %v416, %v503
    %506 = vst [vmem:[#allocation3] sm:$0xff] %v505
    %v507 = vld [vmem:[#allocation4] sm:$0xff]
    %v508 = vadd.f32 %v286, %v287
    %v509 = vadd.f32 %v508, %v288
    %v510 = vadd.f32 %v509, %v289
    %v511 = vrot.slane %v510, 4
    %v512 = vadd.f32 %v510, %v511
    %v513 = vrot.slane %v512, 2
    %v514 = vadd.f32 %v512, %v513
    %v515 = vrot.slane %v514, 1
    %v516 = vadd.f32 %v514, %v515
    %v517 = vadd.f32 %v290, %v291
    %v518 = vadd.f32 %v517, %v292
    %v519 = vadd.f32 %v518, %v293
    %v520 = vrot.slane %v519, 4
    %v521 = vadd.f32 %v519, %v520
    %v522 = vrot.slane %v521, 2
    %v523 = vadd.f32 %v521, %v522
    %v524 = vrot.slane %v523, 1
    %v525 = vadd.f32 %v523, %v524
    %v526 = vadd.f32 %v294, %v295
    %v527 = vadd.f32 %v526, %v296
    %v528 = vadd.f32 %v527, %v297
    %v529 = vrot.slane %v528, 4
    %v530 = vadd.f32 %v528, %v529
    %v531 = vrot.slane %v530, 2
    %v532 = vadd.f32 %v530, %v531
    %v533 = vrot.slane %v532, 1
    %v534 = vadd.f32 %v532, %v533
    %v535 = vadd.f32 %v298, %v299
    %v536 = vadd.f32 %v535, %v300
    %v537 = vadd.f32 %v536, %v301
    %v538 = vrot.slane %v537, 4
    %v539 = vadd.f32 %v537, %v538
    %v540 = vrot.slane %v539, 2
    %v541 = vadd.f32 %v539, %v540
    %v542 = vrot.slane %v541, 1
    %v543 = vadd.f32 %v541, %v542
    %v544 = vadd.f32 %v302, %v303
    %v545 = vadd.f32 %v544, %v304
    %v546 = vadd.f32 %v545, %v305
    %v547 = vrot.slane %v546, 4
    %v548 = vadd.f32 %v546, %v547
    %v549 = vrot.slane %v548, 2
    %v550 = vadd.f32 %v548, %v549
    %v551 = vrot.slane %v550, 1
    %v552 = vadd.f32 %v550, %v551
    %v553 = vadd.f32 %v306, %v307
    %v554 = vadd.f32 %v553, %v308
    %v555 = vadd.f32 %v554, %v309
    %v556 = vrot.slane %v555, 4
    %v557 = vadd.f32 %v555, %v556
    %v558 = vrot.slane %v557, 2
    %v559 = vadd.f32 %v557, %v558
    %v560 = vrot.slane %v559, 1
    %v561 = vadd.f32 %v559, %v560
    %v562 = vadd.f32 %v310, %v311
    %v563 = vadd.f32 %v562, %v312
    %v564 = vadd.f32 %v563, %v313
    %v565 = vrot.slane %v564, 4
    %v566 = vadd.f32 %v564, %v565
    %v567 = vrot.slane %v566, 2
    %v568 = vadd.f32 %v566, %v567
    %v569 = vrot.slane %v568, 1
    %v570 = vadd.f32 %v568, %v569
    %v571 = vadd.f32 %v314, %v315
    %v572 = vadd.f32 %v571, %v316
    %v573 = vadd.f32 %v572, %v317
    %v574 = vrot.slane %v573, 4
    %v575 = vadd.f32 %v573, %v574
    %v576 = vrot.slane %v575, 2
    %v577 = vadd.f32 %v575, %v576
    %v578 = vrot.slane %v577, 1
    %v579 = vadd.f32 %v577, %v578
    %v588 = vsel %vm399, %v525, %v516
    %v589 = vsel %vm401, %v534, %v588
    %v590 = vsel %vm403, %v543, %v589
    %v591 = vsel %vm405, %v552, %v590
    %v592 = vsel %vm407, %v561, %v591
    %v593 = vsel %vm409, %v570, %v592
    %v594 = vsel %vm411, %v579, %v593
    %v596 = vadd.f32 %v507, %v594
    %597 = vst [vmem:[#allocation4] sm:$0xff] %v596
    %v598 = vld [vmem:[#allocation5] sm:$0xff]
    %v599 = vadd.f32 %v158, %v159
    %v600 = vadd.f32 %v599, %v160
    %v601 = vadd.f32 %v600, %v161
    %v602 = vrot.slane %v601, 4
    %v603 = vadd.f32 %v601, %v602
    %v604 = vrot.slane %v603, 2
    %v605 = vadd.f32 %v603, %v604
    %v606 = vrot.slane %v605, 1
    %v607 = vadd.f32 %v605, %v606
    %v608 = vadd.f32 %v162, %v163
    %v609 = vadd.f32 %v608, %v164
    %v610 = vadd.f32 %v609, %v165
    %v611 = vrot.slane %v610, 4
    %v612 = vadd.f32 %v610, %v611
    %v613 = vrot.slane %v612, 2
    %v614 = vadd.f32 %v612, %v613
    %v615 = vrot.slane %v614, 1
    %v616 = vadd.f32 %v614, %v615
    %v617 = vadd.f32 %v166, %v167
    %v618 = vadd.f32 %v617, %v168
    %v619 = vadd.f32 %v618, %v169
    %v620 = vrot.slane %v619, 4
    %v621 = vadd.f32 %v619, %v620
    %v622 = vrot.slane %v621, 2
    %v623 = vadd.f32 %v621, %v622
    %v624 = vrot.slane %v623, 1
    %v625 = vadd.f32 %v623, %v624
    %v626 = vadd.f32 %v170, %v171
    %v627 = vadd.f32 %v626, %v172
    %v628 = vadd.f32 %v627, %v173
    %v629 = vrot.slane %v628, 4
    %v630 = vadd.f32 %v628, %v629
    %v631 = vrot.slane %v630, 2
    %v632 = vadd.f32 %v630, %v631
    %v633 = vrot.slane %v632, 1
    %v634 = vadd.f32 %v632, %v633
    %v635 = vadd.f32 %v174, %v175
    %v636 = vadd.f32 %v635, %v176
    %v637 = vadd.f32 %v636, %v177
    %v638 = vrot.slane %v637, 4
    %v639 = vadd.f32 %v637, %v638
    %v640 = vrot.slane %v639, 2
    %v641 = vadd.f32 %v639, %v640
    %v642 = vrot.slane %v641, 1
    %v643 = vadd.f32 %v641, %v642
    %v644 = vadd.f32 %v178, %v179
    %v645 = vadd.f32 %v644, %v180
    %v646 = vadd.f32 %v645, %v181
    %v647 = vrot.slane %v646, 4
    %v648 = vadd.f32 %v646, %v647
    %v649 = vrot.slane %v648, 2
    %v650 = vadd.f32 %v648, %v649
    %v651 = vrot.slane %v650, 1
    %v652 = vadd.f32 %v650, %v651
    %v653 = vadd.f32 %v182, %v183
    %v654 = vadd.f32 %v653, %v184
    %v655 = vadd.f32 %v654, %v185
    %v656 = vrot.slane %v655, 4
    %v657 = vadd.f32 %v655, %v656
    %v658 = vrot.slane %v657, 2
    %v659 = vadd.f32 %v657, %v658
    %v660 = vrot.slane %v659, 1
    %v661 = vadd.f32 %v659, %v660
    %v662 = vadd.f32 %v186, %v187
    %v663 = vadd.f32 %v662, %v188
    %v664 = vadd.f32 %v663, %v189
    %v665 = vrot.slane %v664, 4
    %v666 = vadd.f32 %v664, %v665
    %v667 = vrot.slane %v666, 2
    %v668 = vadd.f32 %v666, %v667
    %v669 = vrot.slane %v668, 1
    %v670 = vadd.f32 %v668, %v669
    %v679 = vsel %vm399, %v616, %v607
    %v680 = vsel %vm401, %v625, %v679
    %v681 = vsel %vm403, %v634, %v680
    %v682 = vsel %vm405, %v643, %v681
    %v683 = vsel %vm407, %v652, %v682
    %v684 = vsel %vm409, %v661, %v683
    %v685 = vsel %vm411, %v670, %v684
    %v687 = vadd.f32 %v598, %v685
    %688 = vst [vmem:[#allocation5] sm:$0xff] %v687
    // Predicated region
    $region30: #{tpu_custom_call.1} parent=1 // pred_check
      %p689 = pneg %p86
    $region31: #{tpu_custom_call.1} parent=1 // pred_check_branch
      %691 = sbr.rel (%p689) target = $region33
    $region32: #{tpu_custom_call.1} parent=1 // pred_region
      %v692 = vld [vmem:[#allocation2] sm:$0xff]
      %693 = vst [vmem:[#allocation12] sm:$0xff] %v692
      %v694 = vld [vmem:[#allocation3] sm:$0xff]
      %s695 = scalar_lea.vmem [#allocation12], 8
      %696 = vst [vmem:[%s695] sm:$0xff] %v694
      %v697 = vld [vmem:[#allocation4] sm:$0xff]
      %s698 = scalar_lea.vmem [#allocation12], 16
      %699 = vst [vmem:[%s698] sm:$0xff] %v697
      %v700 = vld [vmem:[#allocation5] sm:$0xff]
      %s701 = scalar_lea.vmem [#allocation12], 24
      %702 = vst [vmem:[%s701] sm:$0xff] %v700
    $region33: #{tpu_custom_call.1} parent=1 // pred_fallthru
      _
    // Predicated region
    $region34: #{tpu_custom_call.1} parent=1 // pred_check
      _
    $region35: #{tpu_custom_call.1} parent=1 // pred_check_branch
      %704 = sbr.rel (0) target = $region37
    $region36: #{tpu_custom_call.1} parent=1 // pred_region
      %s706 = ssub.s32 512, 512
      %707 = vsyncadd [#allocation8], %s706
      %s708 = sshll.u32 [#allocation12], 4
      %s709 = int_to_ptr.vmem [resolvable:$true] %s708
      %714 = dma.vmem_to_hbm [thread:$0]  %s709, 512, %s3, [#allocation8], 128, 128, 8
    $region37: #{tpu_custom_call.1} parent=1 // pred_fallthru
      _
    // Predicated region
    $region38: #{tpu_custom_call.1} parent=1 // pred_check
      _
    $region39: #{tpu_custom_call.1} parent=1 // pred_check_branch
      %716 = sbr.rel (0) target = $region41
    $region40: #{tpu_custom_call.1} parent=1 // pred_region
      %717 = dma.done [#allocation8], 512
    $region41: #{tpu_custom_call.1} parent=1 // pred_fallthru
      _
    %718 = vsyncpa [#allocation7], 1
    %719 = vsyncpa [#allocation10], 1
    %720 = vsyncpa [#allocation8], 1

</llo_original>
